<compile_context>
chip_gen: v7x
topology: tpu7x:2x2x1
jax: 0.10.0
libtpu: 0.0.40
codegen_flags: <defaults>
</compile_context>

<pallas_src>
import jax
import jax.numpy as jnp
from jax.experimental import pallas as pl
from jax.experimental.pallas import tpu as pltpu

LANE = 128
SUBLANE = 8


def _round_up(x, m):
    return ((x + m - 1) // m) * m


def _distill_kernel(x_ref, w1_ref, b1_ref, w2_ref, b2_ref, o_ref):
    """Fused student+teacher 2-layer MLP forward.

    x_ref  : [TM, D_IN]     bf16  batch tile (streams over the grid)
    w1_ref : [D_IN, 2*HP]   bf16  [W1_student_pad | W1_teacher_pad]
    b1_ref : [1, 2*HP]      f32
    w2_ref : [2*HP, OW]     bf16  block-structured second layer (student rows
                                  feed lanes 0:nc, teacher rows feed t_off:t_off+nc)
    b2_ref : [1, OW]        f32
    o_ref  : [TM, OW]       f32   packed student+teacher logits, lane-dense
    """
    # Shared first matmul on the MXU: bf16 x bf16 -> f32 accumulate, N = 2*HP.
    h = jnp.dot(x_ref[...], w1_ref[...], preferred_element_type=jnp.float32)
    # Bias + ReLU epilogue in f32 on the VPU (v5e has no bf16 VPU path).
    h = jnp.maximum(h + b1_ref[...], 0.0)
    hb = h.astype(jnp.bfloat16)  # single explicit down-cast before second dot

    # One block-structured second matmul produces BOTH networks' logits in a
    # single lane-dense 128-wide store (zero blocks in w2 keep them disjoint).
    o_ref[...] = (
        jnp.dot(hb, w2_ref[...], preferred_element_type=jnp.float32) + b2_ref[...]
    )


def distiller_forward(x_nchw, student_params, teacher_params, *, tile_m=512):
    """Pallas equivalent of Distiller.forward: returns (student_out, teacher_out)."""
    B = x_nchw.shape[0]
    x2d = x_nchw.reshape(B, -1)                      # glue: flatten NCHW -> [B, C*H*W]
    d_in = x2d.shape[1]

    w1s, b1s, w2s, b2s = student_params
    w1t, b1t, w2t, b2t = teacher_params
    h_s, h_t = w1s.shape[1], w1t.shape[1]
    n_classes = w2s.shape[1]
    assert w2t.shape[1] == n_classes

    # Lane-dense padded hidden width shared by both networks.
    hp = _round_up(max(h_s, h_t), LANE)

    # Output packing: if both logit vectors fit in one 128-lane tile, pack them
    # (student at lanes [0:nc], teacher at [64:64+nc]) to halve output traffic.
    if 2 * n_classes <= LANE:
        out_w = LANE
        t_off = LANE // 2
    else:
        np_ = _round_up(n_classes, LANE)
        out_w = 2 * np_
        t_off = np_

    # ---- one-time parameter packing (wrapper-side glue, outside the kernel) ----
    w1c = jnp.zeros((d_in, 2 * hp), jnp.float32)
    w1c = w1c.at[:, :h_s].set(w1s)
    w1c = w1c.at[:, hp:hp + h_t].set(w1t)
    b1c = jnp.zeros((1, 2 * hp), jnp.float32)
    b1c = b1c.at[:, :h_s].set(b1s.reshape(1, -1))
    b1c = b1c.at[:, hp:hp + h_t].set(b1t.reshape(1, -1))

    w2c = jnp.zeros((2 * hp, out_w), jnp.float32)
    w2c = w2c.at[:h_s, :n_classes].set(w2s)
    w2c = w2c.at[hp:hp + h_t, t_off:t_off + n_classes].set(w2t)
    b2c = jnp.zeros((1, out_w), jnp.float32)
    b2c = b2c.at[:, :n_classes].set(b2s.reshape(1, -1))
    b2c = b2c.at[:, t_off:t_off + n_classes].set(b2t.reshape(1, -1))

    w1c = w1c.astype(jnp.bfloat16)
    w2c = w2c.astype(jnp.bfloat16)

    # Batch tiling: pad B to a sublane multiple, pick a tile, grid over tiles.
    b_pad = _round_up(max(B, SUBLANE), SUBLANE)
    tm = min(tile_m, b_pad)
    b_pad = _round_up(b_pad, tm)
    x_p = jnp.pad(x2d, ((0, b_pad - B), (0, 0))).astype(jnp.bfloat16)

    out = pl.pallas_call(
        _distill_kernel,
        out_shape=jax.ShapeDtypeStruct((b_pad, out_w), jnp.float32),
        grid_spec=pltpu.PrefetchScalarGridSpec(
            num_scalar_prefetch=0,
            grid=(b_pad // tm,),
            in_specs=[
                pl.BlockSpec((tm, d_in), lambda i: (i, 0)),       # x tile streams
                pl.BlockSpec((d_in, 2 * hp), lambda i: (0, 0)),   # weights stay resident
                pl.BlockSpec((1, 2 * hp), lambda i: (0, 0)),
                pl.BlockSpec((2 * hp, out_w), lambda i: (0, 0)),
                pl.BlockSpec((1, out_w), lambda i: (0, 0)),
            ],
            out_specs=pl.BlockSpec((tm, out_w), lambda i: (i, 0)),
        ),
        compiler_params=pltpu.CompilerParams(
            dimension_semantics=("parallel",),   # megacore sharding of the batch axis
        ),
    )(x_p, w1c, b1c, w2c, b2c)

    # Slice padded batch / packed lanes back off in the JAX wrapper.
    student_out = out[:B, :n_classes]
    teacher_out = out[:B, t_off:t_off + n_classes]
    return student_out, teacher_out


def _init_mlp_params(key, d_in, d_hidden, d_out):
    """Deterministic synthetic parameter init (shapes only matter here)."""
    k1, k2, k3, k4 = jax.random.split(key, 4)
    w1 = jax.random.normal(k1, (d_in, d_hidden), jnp.float32) * (1.0 / jnp.sqrt(d_in))
    b1 = jax.random.normal(k2, (1, d_hidden), jnp.float32) * 0.01
    w2 = jax.random.normal(k3, (d_hidden, d_out), jnp.float32) * (1.0 / jnp.sqrt(d_hidden))
    b2 = jax.random.normal(k4, (1, d_out), jnp.float32) * 0.01
    return (w1, b1, w2, b2)


if __name__ == "__main__":
    # Small shapes consistent with an NCHW image input.
    B, C, H, W = 2, 4, 16, 16
    D_IN = C * H * W            # 1024
    N_CLASSES = 10
    STUDENT_HIDDEN = 32
    TEACHER_HIDDEN = 128

    key = jax.random.PRNGKey(0)
    kx, ks, kt = jax.random.split(key, 3)

    x = jax.random.normal(kx, (B, C, H, W), jnp.float32)
    student_params = _init_mlp_params(ks, D_IN, STUDENT_HIDDEN, N_CLASSES)
    teacher_params = _init_mlp_params(kt, D_IN, TEACHER_HIDDEN, N_CLASSES)

    student_out, teacher_out = distiller_forward(x, student_params, teacher_params)
    jax.block_until_ready((student_out, teacher_out))

    # Numerics-matched plain-JAX reference (same bf16 matmul / f32 accumulate).
    def ref_mlp(x2d, w1, b1, w2, b2):
        h = jnp.dot(x2d.astype(jnp.bfloat16), w1.astype(jnp.bfloat16),
                    preferred_element_type=jnp.float32) + b1
        h = jnp.maximum(h, 0.0)
        return jnp.dot(h.astype(jnp.bfloat16), w2.astype(jnp.bfloat16),
                       preferred_element_type=jnp.float32) + b2

    x2d = x.reshape(B, -1)
    s_ref = ref_mlp(x2d, *student_params)
    t_ref = ref_mlp(x2d, *teacher_params)
    assert student_out.shape == (B, N_CLASSES) and teacher_out.shape == (B, N_CLASSES)
    assert jnp.allclose(student_out, s_ref, atol=1e-2, rtol=1e-2)
    assert jnp.allclose(teacher_out, t_ref, atol=1e-2, rtol=1e-2)

    # Loose check against the pure-f32 reference (bf16 matmul tolerance).
    s_ref32 = jnp.maximum(x2d @ student_params[0] + student_params[1], 0.0) @ student_params[2] + student_params[3]
    t_ref32 = jnp.maximum(x2d @ teacher_params[0] + teacher_params[1], 0.0) @ teacher_params[2] + teacher_params[3]
    assert jnp.allclose(student_out, s_ref32, atol=1e-1, rtol=1e-1)
    assert jnp.allclose(teacher_out, t_ref32, atol=1e-1, rtol=1e-1)

    print("KERNEL_OK")
</pallas_src>

<mosaic_0001>
module attributes {stable_mosaic.version = 11 : i64} {
  func.func @_distill_kernel(%arg0: i32, %arg1: memref<8x1024xbf16, #tpu.memory_space<vmem>>, %arg2: memref<1024x256xbf16, #tpu.memory_space<vmem>>, %arg3: memref<1x256xf32, #tpu.memory_space<vmem>>, %arg4: memref<256x128xbf16, #tpu.memory_space<vmem>>, %arg5: memref<1x128xf32, #tpu.memory_space<vmem>>, %arg6: memref<8x128xf32, #tpu.memory_space<vmem>>) attributes {dimension_semantics = [#tpu.dimension_semantics<parallel>], iteration_bounds = array<i64: 1>, scalar_prefetch = 0 : i64, scratch_operands = 0 : i64, tpu.core_type = #tpu.core_type<tc>, window_params = [{transform_indices = @transform_0, window_bounds = array<i64: 8, 1024>}, {pipeline_mode = #tpu.pipeline_mode<synchronous>, transform_indices = @transform_1, window_bounds = array<i64: 1024, 256>}, {pipeline_mode = #tpu.pipeline_mode<synchronous>, transform_indices = @transform_2, window_bounds = array<i64: 1, 256>}, {pipeline_mode = #tpu.pipeline_mode<synchronous>, transform_indices = @transform_3, window_bounds = array<i64: 256, 128>}, {pipeline_mode = #tpu.pipeline_mode<synchronous>, transform_indices = @transform_4, window_bounds = array<i64: 1, 128>}, {transform_indices = @transform_5, window_bounds = array<i64: 8, 128>}]} {
    %c0 = arith.constant 0 : index
    %c0_0 = arith.constant 0 : index
    %0 = vector.load %arg1[%c0, %c0_0] : memref<8x1024xbf16, #tpu.memory_space<vmem>>, vector<8x1024xbf16>
    %c0_1 = arith.constant 0 : index
    %c0_2 = arith.constant 0 : index
    %1 = vector.load %arg2[%c0_1, %c0_2] : memref<1024x256xbf16, #tpu.memory_space<vmem>>, vector<1024x256xbf16>
    %cst = arith.constant dense<0.000000e+00> : vector<8x256xf32>
    %2 = tpu.matmul %0, %1, %cst {dimension_numbers = #tpu.dot_dimension_numbers<[1], [0], [0], [1], [0, 0, 1, 1], [], []>} : vector<8x1024xbf16>, vector<1024x256xbf16>, vector<8x256xf32> -> vector<8x256xf32>
    %c0_3 = arith.constant 0 : index
    %c0_4 = arith.constant 0 : index
    %3 = vector.load %arg3[%c0_3, %c0_4] : memref<1x256xf32, #tpu.memory_space<vmem>>, vector<1x256xf32>
    %4 = vector.broadcast %3 : vector<1x256xf32> to vector<8x256xf32>
    %5 = arith.addf %2, %4 : vector<8x256xf32>
    %cst_5 = arith.constant 0.000000e+00 : f32
    %6 = vector.broadcast %cst_5 : f32 to vector<8x256xf32>
    %7 = arith.maximumf %5, %6 : vector<8x256xf32>
    %8 = arith.truncf %7 : vector<8x256xf32> to vector<8x256xbf16>
    %c0_6 = arith.constant 0 : index
    %c0_7 = arith.constant 0 : index
    %9 = vector.load %arg4[%c0_6, %c0_7] : memref<256x128xbf16, #tpu.memory_space<vmem>>, vector<256x128xbf16>
    %cst_8 = arith.constant dense<0.000000e+00> : vector<8x128xf32>
    %10 = tpu.matmul %8, %9, %cst_8 {dimension_numbers = #tpu.dot_dimension_numbers<[1], [0], [0], [1], [0, 0, 1, 1], [], []>} : vector<8x256xbf16>, vector<256x128xbf16>, vector<8x128xf32> -> vector<8x128xf32>
    %c0_9 = arith.constant 0 : index
    %c0_10 = arith.constant 0 : index
    %11 = vector.load %arg5[%c0_9, %c0_10] : memref<1x128xf32, #tpu.memory_space<vmem>>, vector<1x128xf32>
    %12 = vector.broadcast %11 : vector<1x128xf32> to vector<8x128xf32>
    %13 = arith.addf %10, %12 : vector<8x128xf32>
    %c0_11 = arith.constant 0 : index
    %c0_12 = arith.constant 0 : index
    %14 = vector.load %arg6[%c0_11, %c0_12] : memref<8x128xf32, #tpu.memory_space<vmem>>, vector<8x128xf32>
    tpu.vector_store %arg6[%c0_11, %c0_12], %13 {strides = array<i32>} : memref<8x128xf32, #tpu.memory_space<vmem>>, vector<8x128xf32>,
    return
  }
  func.func @transform_0(%arg0: i32) -> (i32, i32) {
    %c0_i32 = arith.constant 0 : i32
    %c0_i32_0 = arith.constant 0 : i32
    return %arg0, %c0_i32 : i32, i32
  }
  func.func @transform_1(%arg0: i32) -> (i32, i32) {
    %c0_i32 = arith.constant 0 : i32
    %c0_i32_0 = arith.constant 0 : i32
    %c0_i32_1 = arith.constant 0 : i32
    return %c0_i32, %c0_i32_0 : i32, i32
  }
  func.func @transform_2(%arg0: i32) -> (i32, i32) {
    %c0_i32 = arith.constant 0 : i32
    %c0_i32_0 = arith.constant 0 : i32
    %c0_i32_1 = arith.constant 0 : i32
    return %c0_i32, %c0_i32_0 : i32, i32
  }
  func.func @transform_3(%arg0: i32) -> (i32, i32) {
    %c0_i32 = arith.constant 0 : i32
    %c0_i32_0 = arith.constant 0 : i32
    %c0_i32_1 = arith.constant 0 : i32
    return %c0_i32, %c0_i32_0 : i32, i32
  }
  func.func @transform_4(%arg0: i32) -> (i32, i32) {
    %c0_i32 = arith.constant 0 : i32
    %c0_i32_0 = arith.constant 0 : i32
    %c0_i32_1 = arith.constant 0 : i32
    return %c0_i32, %c0_i32_0 : i32, i32
  }
  func.func @transform_5(%arg0: i32) -> (i32, i32) {
    %c0_i32 = arith.constant 0 : i32
    %c0_i32_0 = arith.constant 0 : i32
    return %arg0, %c0_i32 : i32, i32
  }
}

</mosaic_0001>

<llo_original>
// kernel: tpu_custom_call.1
$region0: #{tpu_custom_call.1}
  #allocation0 [shape = 'u32[]', space=smem, size = 0x4, offset = 0x4, fixed_abs, tag = 'smem constant byte address 0x4 - core index']
  #allocation1 [shape = 'u32[144,128]{1,0:T(1,128)}', space=vmem, size = 0x12000, scoped, tag = 'internal scratch']
  %s0 = inlined_call_operand.hbm [shape: bf16[8,1024], index: 0, kind: input, shape index: {}]
  %s1 = inlined_call_operand.hbm [shape: bf16[1024,256], index: 1, kind: input, shape index: {}]
  %s2 = inlined_call_operand.vmem [shape: f32[1,256], index: 2, kind: input, shape index: {}]
  %s3 = inlined_call_operand.hbm [shape: bf16[256,128], index: 3, kind: input, shape index: {}]
  %s4 = inlined_call_operand.vmem [shape: f32[1,128], index: 4, kind: input, shape index: {}]
  %s5 = inlined_call_operand.hbm [shape: f32[8,128], index: 5, kind: output, shape index: {}]
  %s6 = sld [smem:[#allocation0]]
  $region42: #{tpu_custom_call.1} parent=0
    _
  %s8 = ssub.s32 1, %s6
  %s9 = scalar_select 0, %s8, %s6
  $region1: #{tpu_custom_call.1} parent=0
    #allocation2 [shape = 'u8[16384]{0}', space=vmem, size = 0x4000, scoped, tag = 'input window, operand 0, single buffered']
    #allocation3 [shape = 's32[1]{0}', space=sflag, size = 0x4, scoped, tag = 'scoped memory for tpu_custom_call.1']
    #allocation4 [shape = 's32[1]{0}', space=sflag, size = 0x4, scoped, tag = 'scoped memory for tpu_custom_call.1']
    #allocation5 [shape = 'u8[524288]{0}', space=vmem, size = 0x80000, scoped, tag = 'input window, operand 1, single buffered']
    #allocation6 [shape = 's32[1]{0}', space=sflag, size = 0x4, scoped, tag = 'scoped memory for tpu_custom_call.1']
    #allocation7 [shape = 'u8[65536]{0}', space=vmem, size = 0x10000, scoped, tag = 'input window, operand 3, single buffered']
    #allocation8 [shape = 'u8[4096]{0}', space=vmem, size = 0x1000, scoped, tag = 'output window, operand 0, single buffered']
    %10 = vsyncpa [#allocation3], 0
    %11 = vsyncpa [#allocation6], 0
    %12 = vsyncpa [#allocation4], 0
    // Predicated region
    $region2: #{tpu_custom_call.1} parent=1 // pred_check
      _
    $region3: #{tpu_custom_call.1} parent=1 // pred_check_branch
      %14 = sbr.rel (0) target = $region5
    $region4: #{tpu_custom_call.1} parent=1 // pred_region
      %s16 = ssub.s32 512, 512
      %17 = vsyncadd [#allocation3], %s16
      %s19 = sshll.u32 [#allocation2], 4
      %s20 = int_to_ptr.vmem [resolvable:$true] %s19
      %22 = dma.hbm_to_vmem [thread:$0]  %s0, 512, %s20, [#allocation3]
    $region5: #{tpu_custom_call.1} parent=1 // pred_fallthru
      _
    // Predicated region
    $region6: #{tpu_custom_call.1} parent=1 // pred_check
      _
    $region7: #{tpu_custom_call.1} parent=1 // pred_check_branch
      %24 = sbr.rel (0) target = $region9
    $region8: #{tpu_custom_call.1} parent=1 // pred_region
      %s26 = ssub.s32 16384, 16384
      %27 = vsyncadd [#allocation6], %s26
      %s28 = sshll.u32 [#allocation5], 4
      %s29 = int_to_ptr.vmem [resolvable:$true] %s28
      %34 = dma.hbm_to_vmem [thread:$0]  %s1, 16384, %s29, [#allocation6], 128, 128, 8
    $region9: #{tpu_custom_call.1} parent=1 // pred_fallthru
      _
    // Predicated region
    $region10: #{tpu_custom_call.1} parent=1 // pred_check
      _
    $region11: #{tpu_custom_call.1} parent=1 // pred_check_branch
      %36 = sbr.rel (0) target = $region13
    $region12: #{tpu_custom_call.1} parent=1 // pred_region
      _
    $region13: #{tpu_custom_call.1} parent=1 // pred_fallthru
      _
    // Predicated region
    $region14: #{tpu_custom_call.1} parent=1 // pred_check
      _
    $region15: #{tpu_custom_call.1} parent=1 // pred_check_branch
      %38 = sbr.rel (0) target = $region17
    $region16: #{tpu_custom_call.1} parent=1 // pred_region
      %s40 = ssub.s32 2048, 2048
      %41 = vsyncadd [#allocation6], %s40
      %s42 = sshll.u32 [#allocation7], 4
      %s43 = int_to_ptr.vmem [resolvable:$true] %s42
      %48 = dma.hbm_to_vmem [thread:$0]  %s3, 2048, %s43, [#allocation6], 64, 64, 4
    $region17: #{tpu_custom_call.1} parent=1 // pred_fallthru
      _
    // Predicated region
    $region18: #{tpu_custom_call.1} parent=1 // pred_check
      _
    $region19: #{tpu_custom_call.1} parent=1 // pred_check_branch
      %50 = sbr.rel (0) target = $region21
    $region20: #{tpu_custom_call.1} parent=1 // pred_region
      _
    $region21: #{tpu_custom_call.1} parent=1 // pred_fallthru
      _
    // Predicated region
    $region22: #{tpu_custom_call.1} parent=1 // pred_check
      _
    $region23: #{tpu_custom_call.1} parent=1 // pred_check_branch
      %52 = sbr.rel (0) target = $region25
    $region24: #{tpu_custom_call.1} parent=1 // pred_region
      %53 = dma.done [#allocation3], 512
    $region25: #{tpu_custom_call.1} parent=1 // pred_fallthru
      _
    // Predicated region
    $region26: #{tpu_custom_call.1} parent=1 // pred_check
      _
    $region27: #{tpu_custom_call.1} parent=1 // pred_check_branch
      %55 = sbr.rel (0) target = $region29
    $region28: #{tpu_custom_call.1} parent=1 // pred_region
      %56 = dma.done [#allocation6], 16384
    $region29: #{tpu_custom_call.1} parent=1 // pred_fallthru
      _
    // Predicated region
    $region30: #{tpu_custom_call.1} parent=1 // pred_check
      _
    $region31: #{tpu_custom_call.1} parent=1 // pred_check_branch
      %58 = sbr.rel (0) target = $region33
    $region32: #{tpu_custom_call.1} parent=1 // pred_region
      %59 = dma.done [#allocation6], 2048
    $region33: #{tpu_custom_call.1} parent=1 // pred_fallthru
      _
    %v61 = vld [vmem:[#allocation2] sm:$0xff]
    %v62 = vld [vmem:[#allocation2 + $0x8] sm:$0xff]
    %v63 = vld [vmem:[#allocation2 + $0x10] sm:$0xff]
    %v64 = vld [vmem:[#allocation2 + $0x18] sm:$0xff]
    %v65 = vld [vmem:[#allocation5] sm:$0xff]
    %v66 = vld [vmem:[#allocation5 + $0x8] sm:$0xff]
    %v67 = vld [vmem:[#allocation5 + $0x10] sm:$0xff]
    %v68 = vld [vmem:[#allocation5 + $0x18] sm:$0xff]
    %v69 = vld [vmem:[#allocation5 + $0x20] sm:$0xff]
    %v70 = vld [vmem:[#allocation5 + $0x28] sm:$0xff]
    %v71 = vld [vmem:[#allocation5 + $0x30] sm:$0xff]
    %v72 = vld [vmem:[#allocation5 + $0x38] sm:$0xff]
    %v73 = vld [vmem:[#allocation5 + $0x40] sm:$0xff]
    %v74 = vld [vmem:[#allocation5 + $0x48] sm:$0xff]
    %v75 = vld [vmem:[#allocation5 + $0x50] sm:$0xff]
    %v76 = vld [vmem:[#allocation5 + $0x58] sm:$0xff]
    %v77 = vld [vmem:[#allocation5 + $0x60] sm:$0xff]
    %v78 = vld [vmem:[#allocation5 + $0x68] sm:$0xff]
    %v79 = vld [vmem:[#allocation5 + $0x70] sm:$0xff]
    %v80 = vld [vmem:[#allocation5 + $0x78] sm:$0xff]
    %v81 = vld [vmem:[#allocation5 + $0x80] sm:$0xff]
    %v82 = vld [vmem:[#allocation5 + $0x88] sm:$0xff]
    %v83 = vld [vmem:[#allocation5 + $0x90] sm:$0xff]
    %v84 = vld [vmem:[#allocation5 + $0x98] sm:$0xff]
    %v85 = vld [vmem:[#allocation5 + $0xa0] sm:$0xff]
    %v86 = vld [vmem:[#allocation5 + $0xa8] sm:$0xff]
    %v87 = vld [vmem:[#allocation5 + $0xb0] sm:$0xff]
    %v88 = vld [vmem:[#allocation5 + $0xb8] sm:$0xff]
    %v89 = vld [vmem:[#allocation5 + $0xc0] sm:$0xff]
    %v90 = vld [vmem:[#allocation5 + $0xc8] sm:$0xff]
    %v91 = vld [vmem:[#allocation5 + $0xd0] sm:$0xff]
    %v92 = vld [vmem:[#allocation5 + $0xd8] sm:$0xff]
    %v93 = vld [vmem:[#allocation5 + $0xe0] sm:$0xff]
    %v94 = vld [vmem:[#allocation5 + $0xe8] sm:$0xff]
    %v95 = vld [vmem:[#allocation5 + $0xf0] sm:$0xff]
    %v96 = vld [vmem:[#allocation5 + $0xf8] sm:$0xff]
    %v97 = vld [vmem:[#allocation5 + $0x100] sm:$0xff]
    %v98 = vld [vmem:[#allocation5 + $0x108] sm:$0xff]
    %v99 = vld [vmem:[#allocation5 + $0x110] sm:$0xff]
    %v100 = vld [vmem:[#allocation5 + $0x118] sm:$0xff]
    %v101 = vld [vmem:[#allocation5 + $0x120] sm:$0xff]
    %v102 = vld [vmem:[#allocation5 + $0x128] sm:$0xff]
    %v103 = vld [vmem:[#allocation5 + $0x130] sm:$0xff]
    %v104 = vld [vmem:[#allocation5 + $0x138] sm:$0xff]
    %v105 = vld [vmem:[#allocation5 + $0x140] sm:$0xff]
    %v106 = vld [vmem:[#allocation5 + $0x148] sm:$0xff]
    %v107 = vld [vmem:[#allocation5 + $0x150] sm:$0xff]
    %v108 = vld [vmem:[#allocation5 + $0x158] sm:$0xff]
    %v109 = vld [vmem:[#allocation5 + $0x160] sm:$0xff]
    %v110 = vld [vmem:[#allocation5 + $0x168] sm:$0xff]
    %v111 = vld [vmem:[#allocation5 + $0x170] sm:$0xff]
    %v112 = vld [vmem:[#allocation5 + $0x178] sm:$0xff]
    %v113 = vld [vmem:[#allocation5 + $0x180] sm:$0xff]
    %v114 = vld [vmem:[#allocation5 + $0x188] sm:$0xff]
    %v115 = vld [vmem:[#allocation5 + $0x190] sm:$0xff]
    %v116 = vld [vmem:[#allocation5 + $0x198] sm:$0xff]
    %v117 = vld [vmem:[#allocation5 + $0x1a0] sm:$0xff]
    %v118 = vld [vmem:[#allocation5 + $0x1a8] sm:$0xff]
    %v119 = vld [vmem:[#allocation5 + $0x1b0] sm:$0xff]
    %v120 = vld [vmem:[#allocation5 + $0x1b8] sm:$0xff]
    %v121 = vld [vmem:[#allocation5 + $0x1c0] sm:$0xff]
    %v122 = vld [vmem:[#allocation5 + $0x1c8] sm:$0xff]
    %v123 = vld [vmem:[#allocation5 + $0x1d0] sm:$0xff]
    %v124 = vld [vmem:[#allocation5 + $0x1d8] sm:$0xff]
    %v125 = vld [vmem:[#allocation5 + $0x1e0] sm:$0xff]
    %v126 = vld [vmem:[#allocation5 + $0x1e8] sm:$0xff]
    %v127 = vld [vmem:[#allocation5 + $0x1f0] sm:$0xff]
    %v128 = vld [vmem:[#allocation5 + $0x1f8] sm:$0xff]
    %v129 = vld [vmem:[#allocation5 + $0x200] sm:$0xff]
    %v130 = vld [vmem:[#allocation5 + $0x208] sm:$0xff]
    %v131 = vld [vmem:[#allocation5 + $0x210] sm:$0xff]
    %v132 = vld [vmem:[#allocation5 + $0x218] sm:$0xff]
    %v133 = vld [vmem:[#allocation5 + $0x220] sm:$0xff]
    %v134 = vld [vmem:[#allocation5 + $0x228] sm:$0xff]
    %v135 = vld [vmem:[#allocation5 + $0x230] sm:$0xff]
    %v136 = vld [vmem:[#allocation5 + $0x238] sm:$0xff]
    %v137 = vld [vmem:[#allocation5 + $0x240] sm:$0xff]
    %v138 = vld [vmem:[#allocation5 + $0x248] sm:$0xff]
    %v139 = vld [vmem:[#allocation5 + $0x250] sm:$0xff]
    %v140 = vld [vmem:[#allocation5 + $0x258] sm:$0xff]
    %v141 = vld [vmem:[#allocation5 + $0x260] sm:$0xff]
    %v142 = vld [vmem:[#allocation5 + $0x268] sm:$0xff]
    %v143 = vld [vmem:[#allocation5 + $0x270] sm:$0xff]
    %v144 = vld [vmem:[#allocation5 + $0x278] sm:$0xff]
    %v145 = vld [vmem:[#allocation5 + $0x280] sm:$0xff]
    %v146 = vld [vmem:[#allocation5 + $0x288] sm:$0xff]
    %v147 = vld [vmem:[#allocation5 + $0x290] sm:$0xff]
    %v148 = vld [vmem:[#allocation5 + $0x298] sm:$0xff]
    %v149 = vld [vmem:[#allocation5 + $0x2a0] sm:$0xff]
    %v150 = vld [vmem:[#allocation5 + $0x2a8] sm:$0xff]
    %v151 = vld [vmem:[#allocation5 + $0x2b0] sm:$0xff]
    %v152 = vld [vmem:[#allocation5 + $0x2b8] sm:$0xff]
    %v153 = vld [vmem:[#allocation5 + $0x2c0] sm:$0xff]
    %v154 = vld [vmem:[#allocation5 + $0x2c8] sm:$0xff]
    %v155 = vld [vmem:[#allocation5 + $0x2d0] sm:$0xff]
    %v156 = vld [vmem:[#allocation5 + $0x2d8] sm:$0xff]
    %v157 = vld [vmem:[#allocation5 + $0x2e0] sm:$0xff]
    %v158 = vld [vmem:[#allocation5 + $0x2e8] sm:$0xff]
    %v159 = vld [vmem:[#allocation5 + $0x2f0] sm:$0xff]
    %v160 = vld [vmem:[#allocation5 + $0x2f8] sm:$0xff]
    %v161 = vld [vmem:[#allocation5 + $0x300] sm:$0xff]
    %v162 = vld [vmem:[#allocation5 + $0x308] sm:$0xff]
    %v163 = vld [vmem:[#allocation5 + $0x310] sm:$0xff]
    %v164 = vld [vmem:[#allocation5 + $0x318] sm:$0xff]
    %v165 = vld [vmem:[#allocation5 + $0x320] sm:$0xff]
    %v166 = vld [vmem:[#allocation5 + $0x328] sm:$0xff]
    %v167 = vld [vmem:[#allocation5 + $0x330] sm:$0xff]
    %v168 = vld [vmem:[#allocation5 + $0x338] sm:$0xff]
    %v169 = vld [vmem:[#allocation5 + $0x340] sm:$0xff]
    %v170 = vld [vmem:[#allocation5 + $0x348] sm:$0xff]
    %v171 = vld [vmem:[#allocation5 + $0x350] sm:$0xff]
    %v172 = vld [vmem:[#allocation5 + $0x358] sm:$0xff]
    %v173 = vld [vmem:[#allocation5 + $0x360] sm:$0xff]
    %v174 = vld [vmem:[#allocation5 + $0x368] sm:$0xff]
    %v175 = vld [vmem:[#allocation5 + $0x370] sm:$0xff]
    %v176 = vld [vmem:[#allocation5 + $0x378] sm:$0xff]
    %v177 = vld [vmem:[#allocation5 + $0x380] sm:$0xff]
    %v178 = vld [vmem:[#allocation5 + $0x388] sm:$0xff]
    %v179 = vld [vmem:[#allocation5 + $0x390] sm:$0xff]
    %v180 = vld [vmem:[#allocation5 + $0x398] sm:$0xff]
    %v181 = vld [vmem:[#allocation5 + $0x3a0] sm:$0xff]
    %v182 = vld [vmem:[#allocation5 + $0x3a8] sm:$0xff]
    %v183 = vld [vmem:[#allocation5 + $0x3b0] sm:$0xff]
    %v184 = vld [vmem:[#allocation5 + $0x3b8] sm:$0xff]
    %v185 = vld [vmem:[#allocation5 + $0x3c0] sm:$0xff]
    %v186 = vld [vmem:[#allocation5 + $0x3c8] sm:$0xff]
    %v187 = vld [vmem:[#allocation5 + $0x3d0] sm:$0xff]
    %v188 = vld [vmem:[#allocation5 + $0x3d8] sm:$0xff]
    %v189 = vld [vmem:[#allocation5 + $0x3e0] sm:$0xff]
    %v190 = vld [vmem:[#allocation5 + $0x3e8] sm:$0xff]
    %v191 = vld [vmem:[#allocation5 + $0x3f0] sm:$0xff]
    %v192 = vld [vmem:[#allocation5 + $0x3f8] sm:$0xff]
    %v193 = vld [vmem:[%s2] sm:$0x3]
    %v195 = vlaneseq
    %v196 = vshrl.u32 %v195, 7
    %v197 = vsub.s32 0, %v196
    %v198 = vrot.slane %v193, %v197
    %v199 = vlaneseq
    %v200 = vshrl.u32 %v199, 7
    %v201 = vsub.s32 1, %v200
    %v202 = vrot.slane %v193, %v201
    %v209 = vunpack.c.l.b16 %v61
    %v210 = vunpack.c.h.b16 %v61
    %v211 = vunpack.c.l.b16 %v62
    %v212 = vunpack.c.h.b16 %v62
    %v213 = vunpack.c.l.b16 %v63
    %v214 = vunpack.c.h.b16 %v63
    %v215 = vunpack.c.l.b16 %v64
    %v216 = vunpack.c.h.b16 %v64
    %v217 = vpack.c.b16 %v209, %v209
    %v218 = vpack.c.b16 %v210, %v210
    %v219 = vpack.c.b16 %v211, %v211
    %v220 = vpack.c.b16 %v212, %v212
    %v221 = vpack.c.b16 %v213, %v213
    %v222 = vpack.c.b16 %v214, %v214
    %v223 = vpack.c.b16 %v215, %v215
    %v224 = vpack.c.b16 %v216, %v216
    %v361 = vunpack.c.l.b16 %v65
    %v362 = vunpack.c.h.b16 %v65
    %v363 = vunpack.c.l.b16 %v66
    %v364 = vunpack.c.h.b16 %v66
    %v365 = vunpack.c.l.b16 %v67
    %v366 = vunpack.c.h.b16 %v67
    %v367 = vunpack.c.l.b16 %v68
    %v368 = vunpack.c.h.b16 %v68
    %v369 = vunpack.c.l.b16 %v69
    %v370 = vunpack.c.h.b16 %v69
    %v371 = vunpack.c.l.b16 %v70
    %v372 = vunpack.c.h.b16 %v70
    %v373 = vunpack.c.l.b16 %v71
    %v374 = vunpack.c.h.b16 %v71
    %v375 = vunpack.c.l.b16 %v72
    %v376 = vunpack.c.h.b16 %v72
    %v377 = vunpack.c.l.b16 %v73
    %v378 = vunpack.c.h.b16 %v73
    %v379 = vunpack.c.l.b16 %v74
    %v380 = vunpack.c.h.b16 %v74
    %v381 = vunpack.c.l.b16 %v75
    %v382 = vunpack.c.h.b16 %v75
    %v383 = vunpack.c.l.b16 %v76
    %v384 = vunpack.c.h.b16 %v76
    %v385 = vunpack.c.l.b16 %v77
    %v386 = vunpack.c.h.b16 %v77
    %v387 = vunpack.c.l.b16 %v78
    %v388 = vunpack.c.h.b16 %v78
    %v389 = vunpack.c.l.b16 %v79
    %v390 = vunpack.c.h.b16 %v79
    %v391 = vunpack.c.l.b16 %v80
    %v392 = vunpack.c.h.b16 %v80
    %v393 = vunpack.c.l.b16 %v81
    %v394 = vunpack.c.h.b16 %v81
    %v395 = vunpack.c.l.b16 %v82
    %v396 = vunpack.c.h.b16 %v82
    %v397 = vunpack.c.l.b16 %v83
    %v398 = vunpack.c.h.b16 %v83
    %v399 = vunpack.c.l.b16 %v84
    %v400 = vunpack.c.h.b16 %v84
    %v401 = vunpack.c.l.b16 %v85
    %v402 = vunpack.c.h.b16 %v85
    %v403 = vunpack.c.l.b16 %v86
    %v404 = vunpack.c.h.b16 %v86
    %v405 = vunpack.c.l.b16 %v87
    %v406 = vunpack.c.h.b16 %v87
    %v407 = vunpack.c.l.b16 %v88
    %v408 = vunpack.c.h.b16 %v88
    %v409 = vunpack.c.l.b16 %v89
    %v410 = vunpack.c.h.b16 %v89
    %v411 = vunpack.c.l.b16 %v90
    %v412 = vunpack.c.h.b16 %v90
    %v413 = vunpack.c.l.b16 %v91
    %v414 = vunpack.c.h.b16 %v91
    %v415 = vunpack.c.l.b16 %v92
    %v416 = vunpack.c.h.b16 %v92
    %v417 = vunpack.c.l.b16 %v93
    %v418 = vunpack.c.h.b16 %v93
    %v419 = vunpack.c.l.b16 %v94
    %v420 = vunpack.c.h.b16 %v94
    %v421 = vunpack.c.l.b16 %v95
    %v422 = vunpack.c.h.b16 %v95
    %v423 = vunpack.c.l.b16 %v96
    %v424 = vunpack.c.h.b16 %v96
    %v425 = vunpack.c.l.b16 %v97
    %v426 = vunpack.c.h.b16 %v97
    %v427 = vunpack.c.l.b16 %v98
    %v428 = vunpack.c.h.b16 %v98
    %v429 = vunpack.c.l.b16 %v99
    %v430 = vunpack.c.h.b16 %v99
    %v431 = vunpack.c.l.b16 %v100
    %v432 = vunpack.c.h.b16 %v100
    %v433 = vunpack.c.l.b16 %v101
    %v434 = vunpack.c.h.b16 %v101
    %v435 = vunpack.c.l.b16 %v102
    %v436 = vunpack.c.h.b16 %v102
    %v437 = vunpack.c.l.b16 %v103
    %v438 = vunpack.c.h.b16 %v103
    %v439 = vunpack.c.l.b16 %v104
    %v440 = vunpack.c.h.b16 %v104
    %v441 = vunpack.c.l.b16 %v105
    %v442 = vunpack.c.h.b16 %v105
    %v443 = vunpack.c.l.b16 %v106
    %v444 = vunpack.c.h.b16 %v106
    %v445 = vunpack.c.l.b16 %v107
    %v446 = vunpack.c.h.b16 %v107
    %v447 = vunpack.c.l.b16 %v108
    %v448 = vunpack.c.h.b16 %v108
    %v449 = vunpack.c.l.b16 %v109
    %v450 = vunpack.c.h.b16 %v109
    %v451 = vunpack.c.l.b16 %v110
    %v452 = vunpack.c.h.b16 %v110
    %v453 = vunpack.c.l.b16 %v111
    %v454 = vunpack.c.h.b16 %v111
    %v455 = vunpack.c.l.b16 %v112
    %v456 = vunpack.c.h.b16 %v112
    %v457 = vunpack.c.l.b16 %v113
    %v458 = vunpack.c.h.b16 %v113
    %v459 = vunpack.c.l.b16 %v114
    %v460 = vunpack.c.h.b16 %v114
    %v461 = vunpack.c.l.b16 %v115
    %v462 = vunpack.c.h.b16 %v115
    %v463 = vunpack.c.l.b16 %v116
    %v464 = vunpack.c.h.b16 %v116
    %v465 = vunpack.c.l.b16 %v117
    %v466 = vunpack.c.h.b16 %v117
    %v467 = vunpack.c.l.b16 %v118
    %v468 = vunpack.c.h.b16 %v118
    %v469 = vunpack.c.l.b16 %v119
    %v470 = vunpack.c.h.b16 %v119
    %v471 = vunpack.c.l.b16 %v120
    %v472 = vunpack.c.h.b16 %v120
    %v473 = vunpack.c.l.b16 %v121
    %v474 = vunpack.c.h.b16 %v121
    %v475 = vunpack.c.l.b16 %v122
    %v476 = vunpack.c.h.b16 %v122
    %v477 = vunpack.c.l.b16 %v123
    %v478 = vunpack.c.h.b16 %v123
    %v479 = vunpack.c.l.b16 %v124
    %v480 = vunpack.c.h.b16 %v124
    %v481 = vunpack.c.l.b16 %v125
    %v482 = vunpack.c.h.b16 %v125
    %v483 = vunpack.c.l.b16 %v126
    %v484 = vunpack.c.h.b16 %v126
    %v485 = vunpack.c.l.b16 %v127
    %v486 = vunpack.c.h.b16 %v127
    %v487 = vunpack.c.l.b16 %v128
    %v488 = vunpack.c.h.b16 %v128
    %v489 = vunpack.c.l.b16 %v129
    %v490 = vunpack.c.h.b16 %v129
    %v491 = vunpack.c.l.b16 %v130
    %v492 = vunpack.c.h.b16 %v130
    %v493 = vunpack.c.l.b16 %v131
    %v494 = vunpack.c.h.b16 %v131
    %v495 = vunpack.c.l.b16 %v132
    %v496 = vunpack.c.h.b16 %v132
    %v497 = vunpack.c.l.b16 %v133
    %v498 = vunpack.c.h.b16 %v133
    %v499 = vunpack.c.l.b16 %v134
    %v500 = vunpack.c.h.b16 %v134
    %v501 = vunpack.c.l.b16 %v135
    %v502 = vunpack.c.h.b16 %v135
    %v503 = vunpack.c.l.b16 %v136
    %v504 = vunpack.c.h.b16 %v136
    %v505 = vunpack.c.l.b16 %v137
    %v506 = vunpack.c.h.b16 %v137
    %v507 = vunpack.c.l.b16 %v138
    %v508 = vunpack.c.h.b16 %v138
    %v509 = vunpack.c.l.b16 %v139
    %v510 = vunpack.c.h.b16 %v139
    %v511 = vunpack.c.l.b16 %v140
    %v512 = vunpack.c.h.b16 %v140
    %v513 = vunpack.c.l.b16 %v141
    %v514 = vunpack.c.h.b16 %v141
    %v515 = vunpack.c.l.b16 %v142
    %v516 = vunpack.c.h.b16 %v142
    %v517 = vunpack.c.l.b16 %v143
    %v518 = vunpack.c.h.b16 %v143
    %v519 = vunpack.c.l.b16 %v144
    %v520 = vunpack.c.h.b16 %v144
    %v521 = vunpack.c.l.b16 %v145
    %v522 = vunpack.c.h.b16 %v145
    %v523 = vunpack.c.l.b16 %v146
    %v524 = vunpack.c.h.b16 %v146
    %v525 = vunpack.c.l.b16 %v147
    %v526 = vunpack.c.h.b16 %v147
    %v527 = vunpack.c.l.b16 %v148
    %v528 = vunpack.c.h.b16 %v148
    %v529 = vunpack.c.l.b16 %v149
    %v530 = vunpack.c.h.b16 %v149
    %v531 = vunpack.c.l.b16 %v150
    %v532 = vunpack.c.h.b16 %v150
    %v533 = vunpack.c.l.b16 %v151
    %v534 = vunpack.c.h.b16 %v151
    %v535 = vunpack.c.l.b16 %v152
    %v536 = vunpack.c.h.b16 %v152
    %v537 = vunpack.c.l.b16 %v153
    %v538 = vunpack.c.h.b16 %v153
    %v539 = vunpack.c.l.b16 %v154
    %v540 = vunpack.c.h.b16 %v154
    %v541 = vunpack.c.l.b16 %v155
    %v542 = vunpack.c.h.b16 %v155
    %v543 = vunpack.c.l.b16 %v156
    %v544 = vunpack.c.h.b16 %v156
    %v545 = vunpack.c.l.b16 %v157
    %v546 = vunpack.c.h.b16 %v157
    %v547 = vunpack.c.l.b16 %v158
    %v548 = vunpack.c.h.b16 %v158
    %v549 = vunpack.c.l.b16 %v159
    %v550 = vunpack.c.h.b16 %v159
    %v551 = vunpack.c.l.b16 %v160
    %v552 = vunpack.c.h.b16 %v160
    %v553 = vunpack.c.l.b16 %v161
    %v554 = vunpack.c.h.b16 %v161
    %v555 = vunpack.c.l.b16 %v162
    %v556 = vunpack.c.h.b16 %v162
    %v557 = vunpack.c.l.b16 %v163
    %v558 = vunpack.c.h.b16 %v163
    %v559 = vunpack.c.l.b16 %v164
    %v560 = vunpack.c.h.b16 %v164
    %v561 = vunpack.c.l.b16 %v165
    %v562 = vunpack.c.h.b16 %v165
    %v563 = vunpack.c.l.b16 %v166
    %v564 = vunpack.c.h.b16 %v166
    %v565 = vunpack.c.l.b16 %v167
    %v566 = vunpack.c.h.b16 %v167
    %v567 = vunpack.c.l.b16 %v168
    %v568 = vunpack.c.h.b16 %v168
    %v569 = vunpack.c.l.b16 %v169
    %v570 = vunpack.c.h.b16 %v169
    %v571 = vunpack.c.l.b16 %v170
    %v572 = vunpack.c.h.b16 %v170
    %v573 = vunpack.c.l.b16 %v171
    %v574 = vunpack.c.h.b16 %v171
    %v575 = vunpack.c.l.b16 %v172
    %v576 = vunpack.c.h.b16 %v172
    %v577 = vunpack.c.l.b16 %v173
    %v578 = vunpack.c.h.b16 %v173
    %v579 = vunpack.c.l.b16 %v174
    %v580 = vunpack.c.h.b16 %v174
    %v581 = vunpack.c.l.b16 %v175
    %v582 = vunpack.c.h.b16 %v175
    %v583 = vunpack.c.l.b16 %v176
    %v584 = vunpack.c.h.b16 %v176
    %v585 = vunpack.c.l.b16 %v177
    %v586 = vunpack.c.h.b16 %v177
    %v587 = vunpack.c.l.b16 %v178
    %v588 = vunpack.c.h.b16 %v178
    %v589 = vunpack.c.l.b16 %v179
    %v590 = vunpack.c.h.b16 %v179
    %v591 = vunpack.c.l.b16 %v180
    %v592 = vunpack.c.h.b16 %v180
    %v593 = vunpack.c.l.b16 %v181
    %v594 = vunpack.c.h.b16 %v181
    %v595 = vunpack.c.l.b16 %v182
    %v596 = vunpack.c.h.b16 %v182
    %v597 = vunpack.c.l.b16 %v183
    %v598 = vunpack.c.h.b16 %v183
    %v599 = vunpack.c.l.b16 %v184
    %v600 = vunpack.c.h.b16 %v184
    %v601 = vunpack.c.l.b16 %v185
    %v602 = vunpack.c.h.b16 %v185
    %v603 = vunpack.c.l.b16 %v186
    %v604 = vunpack.c.h.b16 %v186
    %v605 = vunpack.c.l.b16 %v187
    %v606 = vunpack.c.h.b16 %v187
    %v607 = vunpack.c.l.b16 %v188
    %v608 = vunpack.c.h.b16 %v188
    %v609 = vunpack.c.l.b16 %v189
    %v610 = vunpack.c.h.b16 %v189
    %v611 = vunpack.c.l.b16 %v190
    %v612 = vunpack.c.h.b16 %v190
    %v613 = vunpack.c.l.b16 %v191
    %v614 = vunpack.c.h.b16 %v191
    %v615 = vunpack.c.l.b16 %v192
    %v616 = vunpack.c.h.b16 %v192
    %v617 = vpack.c.b16 %v363, %v361
    %v618 = vpack.c.b16 %v364, %v362
    %v619 = vpack.c.b16 %v367, %v365
    %v620 = vpack.c.b16 %v368, %v366
    %v621 = vpack.c.b16 %v371, %v369
    %v622 = vpack.c.b16 %v372, %v370
    %v623 = vpack.c.b16 %v375, %v373
    %v624 = vpack.c.b16 %v376, %v374
    %v625 = vpack.c.b16 %v379, %v377
    %v626 = vpack.c.b16 %v380, %v378
    %v627 = vpack.c.b16 %v383, %v381
    %v628 = vpack.c.b16 %v384, %v382
    %v629 = vpack.c.b16 %v387, %v385
    %v630 = vpack.c.b16 %v388, %v386
    %v631 = vpack.c.b16 %v391, %v389
    %v632 = vpack.c.b16 %v392, %v390
    %v633 = vpack.c.b16 %v395, %v393
    %v634 = vpack.c.b16 %v396, %v394
    %v635 = vpack.c.b16 %v399, %v397
    %v636 = vpack.c.b16 %v400, %v398
    %v637 = vpack.c.b16 %v403, %v401
    %v638 = vpack.c.b16 %v404, %v402
    %v639 = vpack.c.b16 %v407, %v405
    %v640 = vpack.c.b16 %v408, %v406
    %v641 = vpack.c.b16 %v411, %v409
    %v642 = vpack.c.b16 %v412, %v410
    %v643 = vpack.c.b16 %v415, %v413
    %v644 = vpack.c.b16 %v416, %v414
    %v645 = vpack.c.b16 %v419, %v417
    %v646 = vpack.c.b16 %v420, %v418
    %v647 = vpack.c.b16 %v423, %v421
    %v648 = vpack.c.b16 %v424, %v422
    %v649 = vpack.c.b16 %v427, %v425
    %v650 = vpack.c.b16 %v428, %v426
    %v651 = vpack.c.b16 %v431, %v429
    %v652 = vpack.c.b16 %v432, %v430
    %v653 = vpack.c.b16 %v435, %v433
    %v654 = vpack.c.b16 %v436, %v434
    %v655 = vpack.c.b16 %v439, %v437
    %v656 = vpack.c.b16 %v440, %v438
    %v657 = vpack.c.b16 %v443, %v441
    %v658 = vpack.c.b16 %v444, %v442
    %v659 = vpack.c.b16 %v447, %v445
    %v660 = vpack.c.b16 %v448, %v446
    %v661 = vpack.c.b16 %v451, %v449
    %v662 = vpack.c.b16 %v452, %v450
    %v663 = vpack.c.b16 %v455, %v453
    %v664 = vpack.c.b16 %v456, %v454
    %v665 = vpack.c.b16 %v459, %v457
    %v666 = vpack.c.b16 %v460, %v458
    %v667 = vpack.c.b16 %v463, %v461
    %v668 = vpack.c.b16 %v464, %v462
    %v669 = vpack.c.b16 %v467, %v465
    %v670 = vpack.c.b16 %v468, %v466
    %v671 = vpack.c.b16 %v471, %v469
    %v672 = vpack.c.b16 %v472, %v470
    %v673 = vpack.c.b16 %v475, %v473
    %v674 = vpack.c.b16 %v476, %v474
    %v675 = vpack.c.b16 %v479, %v477
    %v676 = vpack.c.b16 %v480, %v478
    %v677 = vpack.c.b16 %v483, %v481
    %v678 = vpack.c.b16 %v484, %v482
    %v679 = vpack.c.b16 %v487, %v485
    %v680 = vpack.c.b16 %v488, %v486
    %v681 = vpack.c.b16 %v491, %v489
    %v682 = vpack.c.b16 %v492, %v490
    %v683 = vpack.c.b16 %v495, %v493
    %v684 = vpack.c.b16 %v496, %v494
    %v685 = vpack.c.b16 %v499, %v497
    %v686 = vpack.c.b16 %v500, %v498
    %v687 = vpack.c.b16 %v503, %v501
    %v688 = vpack.c.b16 %v504, %v502
    %v689 = vpack.c.b16 %v507, %v505
    %v690 = vpack.c.b16 %v508, %v506
    %v691 = vpack.c.b16 %v511, %v509
    %v692 = vpack.c.b16 %v512, %v510
    %v693 = vpack.c.b16 %v515, %v513
    %v694 = vpack.c.b16 %v516, %v514
    %v695 = vpack.c.b16 %v519, %v517
    %v696 = vpack.c.b16 %v520, %v518
    %v697 = vpack.c.b16 %v523, %v521
    %v698 = vpack.c.b16 %v524, %v522
    %v699 = vpack.c.b16 %v527, %v525
    %v700 = vpack.c.b16 %v528, %v526
    %v701 = vpack.c.b16 %v531, %v529
    %v702 = vpack.c.b16 %v532, %v530
    %v703 = vpack.c.b16 %v535, %v533
    %v704 = vpack.c.b16 %v536, %v534
    %v705 = vpack.c.b16 %v539, %v537
    %v706 = vpack.c.b16 %v540, %v538
    %v707 = vpack.c.b16 %v543, %v541
    %v708 = vpack.c.b16 %v544, %v542
    %v709 = vpack.c.b16 %v547, %v545
    %v710 = vpack.c.b16 %v548, %v546
    %v711 = vpack.c.b16 %v551, %v549
    %v712 = vpack.c.b16 %v552, %v550
    %v713 = vpack.c.b16 %v555, %v553
    %v714 = vpack.c.b16 %v556, %v554
    %v715 = vpack.c.b16 %v559, %v557
    %v716 = vpack.c.b16 %v560, %v558
    %v717 = vpack.c.b16 %v563, %v561
    %v718 = vpack.c.b16 %v564, %v562
    %v719 = vpack.c.b16 %v567, %v565
    %v720 = vpack.c.b16 %v568, %v566
    %v721 = vpack.c.b16 %v571, %v569
    %v722 = vpack.c.b16 %v572, %v570
    %v723 = vpack.c.b16 %v575, %v573
    %v724 = vpack.c.b16 %v576, %v574
    %v725 = vpack.c.b16 %v579, %v577
    %v726 = vpack.c.b16 %v580, %v578
    %v727 = vpack.c.b16 %v583, %v581
    %v728 = vpack.c.b16 %v584, %v582
    %v729 = vpack.c.b16 %v587, %v585
    %v730 = vpack.c.b16 %v588, %v586
    %v731 = vpack.c.b16 %v591, %v589
    %v732 = vpack.c.b16 %v592, %v590
    %v733 = vpack.c.b16 %v595, %v593
    %v734 = vpack.c.b16 %v596, %v594
    %v735 = vpack.c.b16 %v599, %v597
    %v736 = vpack.c.b16 %v600, %v598
    %v737 = vpack.c.b16 %v603, %v601
    %v738 = vpack.c.b16 %v604, %v602
    %v739 = vpack.c.b16 %v607, %v605
    %v740 = vpack.c.b16 %v608, %v606
    %v741 = vpack.c.b16 %v611, %v609
    %v742 = vpack.c.b16 %v612, %v610
    %v743 = vpack.c.b16 %v615, %v613
    %v744 = vpack.c.b16 %v616, %v614
    %873 = vmatprep.subr.bf16.mxu0 %v618
    %874 = vmatpush1.bf16.msra.mxu0 %v617
    %875 = vmatprep.subr.bf16.mxu0 %v620
    %876 = vmatpush1.bf16.msra.mxu0 %v619
    %877 = vmatprep.subr.bf16.mxu0 %v622
    %878 = vmatpush1.bf16.msra.mxu0 %v621
    %879 = vmatprep.subr.bf16.mxu0 %v624
    %880 = vmatpush1.bf16.msra.mxu0 %v623
    %881 = vmatprep.subr.bf16.mxu0 %v626
    %882 = vmatpush1.bf16.msra.mxu0 %v625
    %883 = vmatprep.subr.bf16.mxu0 %v628
    %884 = vmatpush1.bf16.msra.mxu0 %v627
    %885 = vmatprep.subr.bf16.mxu0 %v630
    %886 = vmatpush1.bf16.msra.mxu0 %v629
    %887 = vmatprep.subr.bf16.mxu0 %v632
    %888 = vmatpush1.bf16.msra.mxu0 %v631
    %889 = vmatprep.subr.bf16.mxu0 %v634
    %890 = vmatpush1.bf16.msra.mxu0 %v633
    %891 = vmatprep.subr.bf16.mxu0 %v636
    %892 = vmatpush1.bf16.msra.mxu0 %v635
    %893 = vmatprep.subr.bf16.mxu0 %v638
    %894 = vmatpush1.bf16.msra.mxu0 %v637
    %895 = vmatprep.subr.bf16.mxu0 %v640
    %896 = vmatpush1.bf16.msra.mxu0 %v639
    %897 = vmatprep.subr.bf16.mxu0 %v642
    %898 = vmatpush1.bf16.msra.mxu0 %v641
    %899 = vmatprep.subr.bf16.mxu0 %v644
    %900 = vmatpush1.bf16.msra.mxu0 %v643
    %901 = vmatprep.subr.bf16.mxu0 %v646
    %902 = vmatpush1.bf16.msra.mxu0 %v645
    %903 = vmatprep.subr.bf16.mxu0 %v648
    %904 = vmatpush1.bf16.msra.mxu0 %v647
    %905 = vmatprep.mubr.bf16.mxu0 %v218
    %906 = vmatmul.mubr.bf16.gmra.mrb[0].mxu0 %v217
    %v907 = vpop.f32.mrb[0].mxu0
    %v908 = vadd.f32 %v198, %v907
    %v909 = vpop.f32.mrb[0].mxu0
    %v910 = vadd.f32 %v202, %v909
    %v911 = vpop.f32.mrb[0].mxu0
    %v912 = vpop.f32.mrb[0].mxu0
    %913 = vdwg.mxu0
    %914 = vmatprep.subr.bf16.mxu0 %v650
    %915 = vmatpush1.bf16.msra.mxu0 %v649
    %916 = vmatprep.subr.bf16.mxu0 %v652
    %917 = vmatpush1.bf16.msra.mxu0 %v651
    %918 = vmatprep.subr.bf16.mxu0 %v654
    %919 = vmatpush1.bf16.msra.mxu0 %v653
    %920 = vmatprep.subr.bf16.mxu0 %v656
    %921 = vmatpush1.bf16.msra.mxu0 %v655
    %922 = vmatprep.subr.bf16.mxu0 %v658
    %923 = vmatpush1.bf16.msra.mxu0 %v657
    %924 = vmatprep.subr.bf16.mxu0 %v660
    %925 = vmatpush1.bf16.msra.mxu0 %v659
    %926 = vmatprep.subr.bf16.mxu0 %v662
    %927 = vmatpush1.bf16.msra.mxu0 %v661
    %928 = vmatprep.subr.bf16.mxu0 %v664
    %929 = vmatpush1.bf16.msra.mxu0 %v663
    %930 = vmatprep.subr.bf16.mxu0 %v666
    %931 = vmatpush1.bf16.msra.mxu0 %v665
    %932 = vmatprep.subr.bf16.mxu0 %v668
    %933 = vmatpush1.bf16.msra.mxu0 %v667
    %934 = vmatprep.subr.bf16.mxu0 %v670
    %935 = vmatpush1.bf16.msra.mxu0 %v669
    %936 = vmatprep.subr.bf16.mxu0 %v672
    %937 = vmatpush1.bf16.msra.mxu0 %v671
    %938 = vmatprep.subr.bf16.mxu0 %v674
    %939 = vmatpush1.bf16.msra.mxu0 %v673
    %940 = vmatprep.subr.bf16.mxu0 %v676
    %941 = vmatpush1.bf16.msra.mxu0 %v675
    %942 = vmatprep.subr.bf16.mxu0 %v678
    %943 = vmatpush1.bf16.msra.mxu0 %v677
    %944 = vmatprep.subr.bf16.mxu0 %v680
    %945 = vmatpush1.bf16.msra.mxu0 %v679
    %946 = vmatprep.mubr.bf16.mxu0 %v220
    %947 = vmatmul.mubr.bf16.gmra.mrb[0].mxu0 %v219
    %v948 = vpop.f32.mrb[0].mxu0
    %v949 = vadd.f32 %v908, %v948
    %v950 = vpop.f32.mrb[0].mxu0
    %v951 = vadd.f32 %v910, %v950
    %v952 = vpop.f32.mrb[0].mxu0
    %v953 = vpop.f32.mrb[0].mxu0
    %954 = vdwg.mxu0
    %955 = vmatprep.subr.bf16.mxu0 %v682
    %956 = vmatpush1.bf16.msra.mxu0 %v681
    %957 = vmatprep.subr.bf16.mxu0 %v684
    %958 = vmatpush1.bf16.msra.mxu0 %v683
    %959 = vmatprep.subr.bf16.mxu0 %v686
    %960 = vmatpush1.bf16.msra.mxu0 %v685
    %961 = vmatprep.subr.bf16.mxu0 %v688
    %962 = vmatpush1.bf16.msra.mxu0 %v687
    %963 = vmatprep.subr.bf16.mxu0 %v690
    %964 = vmatpush1.bf16.msra.mxu0 %v689
    %965 = vmatprep.subr.bf16.mxu0 %v692
    %966 = vmatpush1.bf16.msra.mxu0 %v691
    %967 = vmatprep.subr.bf16.mxu0 %v694
    %968 = vmatpush1.bf16.msra.mxu0 %v693
    %969 = vmatprep.subr.bf16.mxu0 %v696
    %970 = vmatpush1.bf16.msra.mxu0 %v695
    %971 = vmatprep.subr.bf16.mxu0 %v698
    %972 = vmatpush1.bf16.msra.mxu0 %v697
    %973 = vmatprep.subr.bf16.mxu0 %v700
    %974 = vmatpush1.bf16.msra.mxu0 %v699
    %975 = vmatprep.subr.bf16.mxu0 %v702
    %976 = vmatpush1.bf16.msra.mxu0 %v701
    %977 = vmatprep.subr.bf16.mxu0 %v704
    %978 = vmatpush1.bf16.msra.mxu0 %v703
    %979 = vmatprep.subr.bf16.mxu0 %v706
    %980 = vmatpush1.bf16.msra.mxu0 %v705
    %981 = vmatprep.subr.bf16.mxu0 %v708
    %982 = vmatpush1.bf16.msra.mxu0 %v707
    %983 = vmatprep.subr.bf16.mxu0 %v710
    %984 = vmatpush1.bf16.msra.mxu0 %v709
    %985 = vmatprep.subr.bf16.mxu0 %v712
    %986 = vmatpush1.bf16.msra.mxu0 %v711
    %987 = vmatprep.mubr.bf16.mxu0 %v222
    %988 = vmatmul.mubr.bf16.gmra.mrb[0].mxu0 %v221
    %v989 = vpop.f32.mrb[0].mxu0
    %v990 = vadd.f32 %v949, %v989
    %v991 = vpop.f32.mrb[0].mxu0
    %v992 = vadd.f32 %v951, %v991
    %v993 = vpop.f32.mrb[0].mxu0
    %v994 = vpop.f32.mrb[0].mxu0
    %995 = vdwg.mxu0
    %996 = vmatprep.subr.bf16.mxu0 %v714
    %997 = vmatpush1.bf16.msra.mxu0 %v713
    %998 = vmatprep.subr.bf16.mxu0 %v716
    %999 = vmatpush1.bf16.msra.mxu0 %v715
    %1000 = vmatprep.subr.bf16.mxu0 %v718
    %1001 = vmatpush1.bf16.msra.mxu0 %v717
    %1002 = vmatprep.subr.bf16.mxu0 %v720
    %1003 = vmatpush1.bf16.msra.mxu0 %v719
    %1004 = vmatprep.subr.bf16.mxu0 %v722
    %1005 = vmatpush1.bf16.msra.mxu0 %v721
    %1006 = vmatprep.subr.bf16.mxu0 %v724
    %1007 = vmatpush1.bf16.msra.mxu0 %v723
    %1008 = vmatprep.subr.bf16.mxu0 %v726
    %1009 = vmatpush1.bf16.msra.mxu0 %v725
    %1010 = vmatprep.subr.bf16.mxu0 %v728
    %1011 = vmatpush1.bf16.msra.mxu0 %v727
    %1012 = vmatprep.subr.bf16.mxu0 %v730
    %1013 = vmatpush1.bf16.msra.mxu0 %v729
    %1014 = vmatprep.subr.bf16.mxu0 %v732
    %1015 = vmatpush1.bf16.msra.mxu0 %v731
    %1016 = vmatprep.subr.bf16.mxu0 %v734
    %1017 = vmatpush1.bf16.msra.mxu0 %v733
    %1018 = vmatprep.subr.bf16.mxu0 %v736
    %1019 = vmatpush1.bf16.msra.mxu0 %v735
    %1020 = vmatprep.subr.bf16.mxu0 %v738
    %1021 = vmatpush1.bf16.msra.mxu0 %v737
    %1022 = vmatprep.subr.bf16.mxu0 %v740
    %1023 = vmatpush1.bf16.msra.mxu0 %v739
    %1024 = vmatprep.subr.bf16.mxu0 %v742
    %1025 = vmatpush1.bf16.msra.mxu0 %v741
    %1026 = vmatprep.subr.bf16.mxu0 %v744
    %1027 = vmatpush1.bf16.msra.mxu0 %v743
    %1028 = vmatprep.mubr.bf16.mxu0 %v224
    %1029 = vmatmul.mubr.bf16.gmra.mrb[0].mxu0 %v223
    %v1030 = vpop.f32.mrb[0].mxu0
    %v1031 = vadd.f32 %v990, %v1030
    %v1032 = vpop.f32.mrb[0].mxu0
    %v1033 = vadd.f32 %v992, %v1032
    %v1034 = vpop.f32.mrb[0].mxu0
    %v1035 = vpop.f32.mrb[0].mxu0
    %1036 = vdwg.mxu0
    %v1037 = vmax.f32 %v1031, 0.0
    %v1038 = vmax.f32 %v1033, 0.0
    %v1039 = vpack.c.bf16 %v1037, %v1037
    %v1040 = vpack.c.bf16 %v1038, %v1038
    %v1041 = vld [vmem:[#allocation7] sm:$0xf]
    %v1042 = vld [vmem:[#allocation7 + $0x4] sm:$0xf]
    %v1043 = vld [vmem:[#allocation7 + $0x8] sm:$0xf]
    %v1044 = vld [vmem:[#allocation7 + $0xc] sm:$0xf]
    %v1045 = vld [vmem:[#allocation7 + $0x10] sm:$0xf]
    %v1046 = vld [vmem:[#allocation7 + $0x14] sm:$0xf]
    %v1047 = vld [vmem:[#allocation7 + $0x18] sm:$0xf]
    %v1048 = vld [vmem:[#allocation7 + $0x1c] sm:$0xf]
    %v1049 = vld [vmem:[#allocation7 + $0x20] sm:$0xf]
    %v1050 = vld [vmem:[#allocation7 + $0x24] sm:$0xf]
    %v1051 = vld [vmem:[#allocation7 + $0x28] sm:$0xf]
    %v1052 = vld [vmem:[#allocation7 + $0x2c] sm:$0xf]
    %v1053 = vld [vmem:[#allocation7 + $0x30] sm:$0xf]
    %v1054 = vld [vmem:[#allocation7 + $0x34] sm:$0xf]
    %v1055 = vld [vmem:[#allocation7 + $0x38] sm:$0xf]
    %v1056 = vld [vmem:[#allocation7 + $0x3c] sm:$0xf]
    %v1057 = vld [vmem:[#allocation7 + $0x40] sm:$0xf]
    %v1058 = vld [vmem:[#allocation7 + $0x44] sm:$0xf]
    %v1059 = vld [vmem:[#allocation7 + $0x48] sm:$0xf]
    %v1060 = vld [vmem:[#allocation7 + $0x4c] sm:$0xf]
    %v1061 = vld [vmem:[#allocation7 + $0x50] sm:$0xf]
    %v1062 = vld [vmem:[#allocation7 + $0x54] sm:$0xf]
    %v1063 = vld [vmem:[#allocation7 + $0x58] sm:$0xf]
    %v1064 = vld [vmem:[#allocation7 + $0x5c] sm:$0xf]
    %v1065 = vld [vmem:[#allocation7 + $0x60] sm:$0xf]
    %v1066 = vld [vmem:[#allocation7 + $0x64] sm:$0xf]
    %v1067 = vld [vmem:[#allocation7 + $0x68] sm:$0xf]
    %v1068 = vld [vmem:[#allocation7 + $0x6c] sm:$0xf]
    %v1069 = vld [vmem:[#allocation7 + $0x70] sm:$0xf]
    %v1070 = vld [vmem:[#allocation7 + $0x74] sm:$0xf]
    %v1071 = vld [vmem:[#allocation7 + $0x78] sm:$0xf]
    %v1072 = vld [vmem:[#allocation7 + $0x7c] sm:$0xf]
    %v1073 = vld [vmem:[%s4] sm:$0x1]
    %v1075 = vlaneseq
    %v1076 = vshrl.u32 %v1075, 7
    %v1077 = vsub.s32 0, %v1076
    %v1078 = vrot.slane %v1073, %v1077
    %v1112 = vunpack.c.l.b16 %v1041
    %v1113 = vunpack.c.l.b16 %v1042
    %v1114 = vunpack.c.l.b16 %v1043
    %v1115 = vunpack.c.l.b16 %v1044
    %v1116 = vunpack.c.l.b16 %v1045
    %v1117 = vunpack.c.l.b16 %v1046
    %v1118 = vunpack.c.l.b16 %v1047
    %v1119 = vunpack.c.l.b16 %v1048
    %v1120 = vunpack.c.l.b16 %v1049
    %v1121 = vunpack.c.l.b16 %v1050
    %v1122 = vunpack.c.l.b16 %v1051
    %v1123 = vunpack.c.l.b16 %v1052
    %v1124 = vunpack.c.l.b16 %v1053
    %v1125 = vunpack.c.l.b16 %v1054
    %v1126 = vunpack.c.l.b16 %v1055
    %v1127 = vunpack.c.l.b16 %v1056
    %v1128 = vunpack.c.l.b16 %v1057
    %v1129 = vunpack.c.l.b16 %v1058
    %v1130 = vunpack.c.l.b16 %v1059
    %v1131 = vunpack.c.l.b16 %v1060
    %v1132 = vunpack.c.l.b16 %v1061
    %v1133 = vunpack.c.l.b16 %v1062
    %v1134 = vunpack.c.l.b16 %v1063
    %v1135 = vunpack.c.l.b16 %v1064
    %v1136 = vunpack.c.l.b16 %v1065
    %v1137 = vunpack.c.l.b16 %v1066
    %v1138 = vunpack.c.l.b16 %v1067
    %v1139 = vunpack.c.l.b16 %v1068
    %v1140 = vunpack.c.l.b16 %v1069
    %v1141 = vunpack.c.l.b16 %v1070
    %v1142 = vunpack.c.l.b16 %v1071
    %v1143 = vunpack.c.l.b16 %v1072
    %v1144 = vpack.c.b16 %v1113, %v1112
    %v1145 = vpack.c.b16 %v1115, %v1114
    %v1146 = vpack.c.b16 %v1117, %v1116
    %v1147 = vpack.c.b16 %v1119, %v1118
    %v1148 = vpack.c.b16 %v1121, %v1120
    %v1149 = vpack.c.b16 %v1123, %v1122
    %v1150 = vpack.c.b16 %v1125, %v1124
    %v1151 = vpack.c.b16 %v1127, %v1126
    %v1152 = vpack.c.b16 %v1129, %v1128
    %v1153 = vpack.c.b16 %v1131, %v1130
    %v1154 = vpack.c.b16 %v1133, %v1132
    %v1155 = vpack.c.b16 %v1135, %v1134
    %v1156 = vpack.c.b16 %v1137, %v1136
    %v1157 = vpack.c.b16 %v1139, %v1138
    %v1158 = vpack.c.b16 %v1141, %v1140
    %v1159 = vpack.c.b16 %v1143, %v1142
    %1176 = vmatprep.subr.bf16.mxu0 0
    %1177 = vmatpush1.bf16.msra.mxu0 %v1144
    %1178 = vmatprep.subr.bf16.mxu0 0
    %1179 = vmatpush1.bf16.msra.mxu0 %v1145
    %1180 = vmatprep.subr.bf16.mxu0 0
    %1181 = vmatpush1.bf16.msra.mxu0 %v1146
    %1182 = vmatprep.subr.bf16.mxu0 0
    %1183 = vmatpush1.bf16.msra.mxu0 %v1147
    %1184 = vmatprep.subr.bf16.mxu0 0
    %1185 = vmatpush1.bf16.msra.mxu0 %v1148
    %1186 = vmatprep.subr.bf16.mxu0 0
    %1187 = vmatpush1.bf16.msra.mxu0 %v1149
    %1188 = vmatprep.subr.bf16.mxu0 0
    %1189 = vmatpush1.bf16.msra.mxu0 %v1150
    %1190 = vmatprep.subr.bf16.mxu0 0
    %1191 = vmatpush1.bf16.msra.mxu0 %v1151
    %1192 = vmatprep.subr.bf16.mxu0 0
    %1193 = vmatpush1.bf16.msra.mxu0 %v1152
    %1194 = vmatprep.subr.bf16.mxu0 0
    %1195 = vmatpush1.bf16.msra.mxu0 %v1153
    %1196 = vmatprep.subr.bf16.mxu0 0
    %1197 = vmatpush1.bf16.msra.mxu0 %v1154
    %1198 = vmatprep.subr.bf16.mxu0 0
    %1199 = vmatpush1.bf16.msra.mxu0 %v1155
    %1200 = vmatprep.subr.bf16.mxu0 0
    %1201 = vmatpush1.bf16.msra.mxu0 %v1156
    %1202 = vmatprep.subr.bf16.mxu0 0
    %1203 = vmatpush1.bf16.msra.mxu0 %v1157
    %1204 = vmatprep.subr.bf16.mxu0 0
    %1205 = vmatpush1.bf16.msra.mxu0 %v1158
    %1206 = vmatprep.subr.bf16.mxu0 0
    %1207 = vmatpush1.bf16.msra.mxu0 %v1159
    %1208 = vmatprep.mubr.bf16.mxu0 %v1040
    %1209 = vmatmul.mubr.bf16.gmra.mrb[0].mxu0 %v1039
    %v1210 = vpop.f32.mrb[0].mxu0
    %v1211 = vadd.f32 %v1078, %v1210
    %v1212 = vpop.f32.mrb[0].mxu0
    %v1213 = vpop.f32.mrb[0].mxu0
    %v1214 = vpop.f32.mrb[0].mxu0
    %1215 = vdwg.mxu0
    %1216 = vst [vmem:[#allocation8] sm:$0xff] %v1211
    // Predicated region
    $region34: #{tpu_custom_call.1} parent=1 // pred_check
      _
    $region35: #{tpu_custom_call.1} parent=1 // pred_check_branch
      %1218 = sbr.rel (0) target = $region37
    $region36: #{tpu_custom_call.1} parent=1 // pred_region
      %s1220 = ssub.s32 128, 128
      %1221 = vsyncadd [#allocation4], %s1220
      %s1223 = sshll.u32 [#allocation8], 4
      %s1224 = int_to_ptr.vmem [resolvable:$true] %s1223
      %1226 = dma.vmem_to_hbm [thread:$0]  %s1224, 128, %s5, [#allocation4]
    $region37: #{tpu_custom_call.1} parent=1 // pred_fallthru
      _
    // Predicated region
    $region38: #{tpu_custom_call.1} parent=1 // pred_check
      _
    $region39: #{tpu_custom_call.1} parent=1 // pred_check_branch
      %1228 = sbr.rel (0) target = $region41
    $region40: #{tpu_custom_call.1} parent=1 // pred_region
      %1229 = dma.done [#allocation4], 128
    $region41: #{tpu_custom_call.1} parent=1 // pred_fallthru
      _
    %1230 = vsyncpa [#allocation3], 1
    %1231 = vsyncpa [#allocation6], 1
    %1232 = vsyncpa [#allocation4], 1

</llo_original>
